<compile_context>
chip_gen: v5e
topology: v5e:2x2
jax: 0.10.0
libtpu: 0.0.40
codegen_flags: <defaults>
</compile_context>

<pallas_src>
import functools

import jax
import jax.numpy as jnp
from jax.experimental import pallas as pl
from jax.experimental.pallas import tpu as pltpu

_LANES = 128
_SUBLANES = 8
_MAX_BLOCK_ROWS = 1024  # 512 KiB per f32 input tile; safe on v5e/v6e/v7x VMEM


def _sse_kernel(a_ref, b_ref, o_ref, acc_ref, *, valid_rows, block_rows,
                blocks_per_split):
    s = pl.program_id(0)  # split ("parallel") axis
    j = pl.program_id(1)  # reduction ("arbitrary") axis

    @pl.when(j == 0)
    def _():
        acc_ref[...] = jnp.zeros_like(acc_ref)

    # Cast on-chip only (keeps HBM traffic at the native input width).
    d = a_ref[...].astype(jnp.float32) - b_ref[...].astype(jnp.float32)
    dd = d * d

    # Mask rows past the true end of the flattened input (only the very last
    # block can be partial; its out-of-bounds rows hold unspecified data).
    start_row = (s * blocks_per_split + j) * block_rows
    row_ids = start_row + jax.lax.broadcasted_iota(jnp.int32, dd.shape, 0)
    dd = jnp.where(row_ids < valid_rows, dd, 0.0)

    # Fold the (block_rows, 128) tile onto the vreg-shaped accumulator with
    # VPU adds only; no cross-lane work and no masked stores in the hot loop.
    acc_ref[...] += jnp.sum(dd.reshape(-1, _SUBLANES, _LANES), axis=0)

    @pl.when(j == pl.num_programs(1) - 1)
    def _():
        # One lane-dense (8, 128) partial-sum block per split; the scalar
        # reduce and the mean happen in the wrapper epilogue.
        o_ref[...] = acc_ref[...]


def _flatten_lane_dense(x: jax.Array) -> jax.Array:
    """Reshape to (rows, 128) with rows % 8 == 0, zero-padding only if required."""
    flat = x.reshape(-1)
    n = flat.shape[0]
    tile = _SUBLANES * _LANES
    if n % tile != 0:
        # Rare path: small zero tail-pad (zeros cancel in the difference).
        flat = jnp.pad(flat, (0, tile - n % tile))
    return flat.reshape(-1, _LANES)


@jax.jit
def recon_loss(rec0: jax.Array, rec1: jax.Array) -> jax.Array:
    """MSE(rec0, rec1) == torch.nn.MSELoss()(rec0, rec1) (mean reduction)."""
    assert rec0.shape == rec1.shape, "MSELoss requires matching shapes"
    n_elems = rec0.size

    a = _flatten_lane_dense(rec0)
    b = _flatten_lane_dense(rec1)
    rows = a.shape[0]

    block_rows = min(rows, _MAX_BLOCK_ROWS)
    blocks_total = pl.cdiv(rows, block_rows)
    # Split across 2 TensorCores (v7x megacore) when the work divides evenly;
    # on 1-TC chips (v5e/v6e) the parallel axis just runs sequentially.
    num_splits = 2 if (blocks_total >= 2 and blocks_total % 2 == 0) else 1
    blocks_per_split = blocks_total // num_splits

    kernel = functools.partial(
        _sse_kernel,
        valid_rows=rows,
        block_rows=block_rows,
        blocks_per_split=blocks_per_split,
    )

    def in_map(s, j):
        return (s * blocks_per_split + j, 0)

    partials = pl.pallas_call(
        kernel,
        out_shape=jax.ShapeDtypeStruct((num_splits * _SUBLANES, _LANES),
                                       jnp.float32),
        grid_spec=pltpu.PrefetchScalarGridSpec(
            num_scalar_prefetch=0,
            grid=(num_splits, blocks_per_split),
            in_specs=[
                pl.BlockSpec((block_rows, _LANES), in_map),
                pl.BlockSpec((block_rows, _LANES), in_map),
            ],
            out_specs=pl.BlockSpec((_SUBLANES, _LANES), lambda s, j: (s, 0)),
            scratch_shapes=[pltpu.VMEM((_SUBLANES, _LANES), jnp.float32)],
        ),
        compiler_params=pltpu.CompilerParams(
            dimension_semantics=("parallel", "arbitrary"),
        ),
    )(a, b)

    # Final reduce + mean (divide by the true element count) in the wrapper.
    sse = jnp.sum(partials)
    return (sse / jnp.float32(n_elems)).astype(jnp.float32)


if __name__ == "__main__":
    key = jax.random.PRNGKey(0)
    k0, k1 = jax.random.split(key)

    # Small NCHW-shaped pair, as the forward implies Rec = (reconstruction, target).
    shape = (2, 4, 16, 16)
    rec0 = jax.random.normal(k0, shape, dtype=jnp.float32)
    rec1 = jax.random.normal(k1, shape, dtype=jnp.float32)

    loss = recon_loss(rec0, rec1)
    loss = jax.block_until_ready(loss)

    # Cross-check against plain-JAX reference (same semantics as nn.MSELoss).
    ref = jnp.mean((rec0 - rec1) ** 2)
    assert jnp.allclose(loss, ref, rtol=1e-5, atol=1e-6), (loss, ref)

    print("KERNEL_OK")
</pallas_src>

<mosaic_0001>
module attributes {stable_mosaic.version = 11 : i64} {
  func.func @_sse_kernel(%arg0: i32, %arg1: i32, %arg2: memref<16x128xf32, #tpu.memory_space<vmem>>, %arg3: memref<16x128xf32, #tpu.memory_space<vmem>>, %arg4: memref<8x128xf32, #tpu.memory_space<vmem>>, %arg5: memref<8x128xf32, #tpu.memory_space<vmem>>) attributes {dimension_semantics = [#tpu.dimension_semantics<parallel>, #tpu.dimension_semantics<arbitrary>], iteration_bounds = array<i64: 1, 1>, scalar_prefetch = 0 : i64, scratch_operands = 1 : i64, tpu.core_type = #tpu.core_type<tc>, window_params = [{transform_indices = @transform_0, window_bounds = array<i64: 16, 128>}, {transform_indices = @transform_1, window_bounds = array<i64: 16, 128>}, {transform_indices = @transform_2, window_bounds = array<i64: 8, 128>}]} {
    %c0_i32 = arith.constant 0 : i32
    %0 = arith.cmpi eq, %arg1, %c0_i32 : i32
    %1 = arith.extui %0 : i1 to i32
    %c0_i32_0 = arith.constant 0 : i32
    %2 = arith.cmpi ne, %1, %c0_i32_0 : i32
    scf.if %2 {
      %cst_12 = arith.constant 0.000000e+00 : f32
      %25 = vector.broadcast %cst_12 : f32 to vector<8x128xf32>
      %c0_13 = arith.constant 0 : index
      %c0_14 = arith.constant 0 : index
      %26 = vector.load %arg5[%c0_13, %c0_14] : memref<8x128xf32, #tpu.memory_space<vmem>>, vector<8x128xf32>
      tpu.vector_store %arg5[%c0_13, %c0_14], %25 {strides = array<i32>} : memref<8x128xf32, #tpu.memory_space<vmem>>, vector<8x128xf32>,
    } else {
    }
    %c0 = arith.constant 0 : index
    %c0_1 = arith.constant 0 : index
    %3 = vector.load %arg2[%c0, %c0_1] : memref<16x128xf32, #tpu.memory_space<vmem>>, vector<16x128xf32>
    %c0_2 = arith.constant 0 : index
    %c0_3 = arith.constant 0 : index
    %4 = vector.load %arg3[%c0_2, %c0_3] : memref<16x128xf32, #tpu.memory_space<vmem>>, vector<16x128xf32>
    %5 = arith.subf %3, %4 : vector<16x128xf32>
    %6 = arith.mulf %5, %5 : vector<16x128xf32>
    %c1_i32 = arith.constant 1 : i32
    %7 = arith.muli %arg0, %c1_i32 : i32
    %8 = arith.addi %7, %arg1 : i32
    %c16_i32 = arith.constant 16 : i32
    %9 = arith.muli %8, %c16_i32 : i32
    %10 = tpu.iota {dimensions = array<i32: 0>} : vector<16x128xi32>
    %11 = vector.broadcast %9 : i32 to vector<16x128xi32>
    %12 = arith.addi %11, %10 : vector<16x128xi32>
    %c16_i32_4 = arith.constant 16 : i32
    %13 = vector.broadcast %c16_i32_4 : i32 to vector<16x128xi32>
    %14 = arith.cmpi slt, %12, %13 : vector<16x128xi32>
    %cst = arith.constant 0.000000e+00 : f32
    %15 = vector.broadcast %cst : f32 to vector<16x128xf32>
    %16 = arith.select %14, %6, %15 : vector<16x128xi1>, vector<16x128xf32>
    %c0_5 = arith.constant 0 : index
    %c0_6 = arith.constant 0 : index
    %17 = vector.load %arg5[%c0_5, %c0_6] : memref<8x128xf32, #tpu.memory_space<vmem>>, vector<8x128xf32>
    %18 = vector.shape_cast %16 : vector<16x128xf32> to vector<2x8x128xf32>
    %cst_7 = arith.constant dense<0.000000e+00> : vector<8x128xf32>
    %19 = vector.multi_reduction <add>, %18, %cst_7 [0] : vector<2x8x128xf32> to vector<8x128xf32>
    %20 = arith.addf %17, %19 : vector<8x128xf32>
    %c0_8 = arith.constant 0 : index
    %c0_9 = arith.constant 0 : index
    %21 = vector.load %arg5[%c0_8, %c0_9] : memref<8x128xf32, #tpu.memory_space<vmem>>, vector<8x128xf32>
    tpu.vector_store %arg5[%c0_8, %c0_9], %20 {strides = array<i32>} : memref<8x128xf32, #tpu.memory_space<vmem>>, vector<8x128xf32>,
    %c0_i32_10 = arith.constant 0 : i32
    %22 = arith.cmpi eq, %arg1, %c0_i32_10 : i32
    %23 = arith.extui %22 : i1 to i32
    %c0_i32_11 = arith.constant 0 : i32
    %24 = arith.cmpi ne, %23, %c0_i32_11 : i32
    scf.if %24 {
      %c0_12 = arith.constant 0 : index
      %c0_13 = arith.constant 0 : index
      %25 = vector.load %arg5[%c0_12, %c0_13] : memref<8x128xf32, #tpu.memory_space<vmem>>, vector<8x128xf32>
      %c0_14 = arith.constant 0 : index
      %c0_15 = arith.constant 0 : index
      %26 = vector.load %arg4[%c0_14, %c0_15] : memref<8x128xf32, #tpu.memory_space<vmem>>, vector<8x128xf32>
      tpu.vector_store %arg4[%c0_14, %c0_15], %25 {strides = array<i32>} : memref<8x128xf32, #tpu.memory_space<vmem>>, vector<8x128xf32>,
    } else {
    }
    return
  }
  func.func @transform_0(%arg0: i32, %arg1: i32) -> (i32, i32) {
    %c1_i32 = arith.constant 1 : i32
    %0 = arith.muli %arg0, %c1_i32 : i32
    %1 = arith.addi %0, %arg1 : i32
    %c0_i32 = arith.constant 0 : i32
    %c0_i32_0 = arith.constant 0 : i32
    return %1, %c0_i32 : i32, i32
  }
  func.func @transform_1(%arg0: i32, %arg1: i32) -> (i32, i32) {
    %c1_i32 = arith.constant 1 : i32
    %0 = arith.muli %arg0, %c1_i32 : i32
    %1 = arith.addi %0, %arg1 : i32
    %c0_i32 = arith.constant 0 : i32
    %c0_i32_0 = arith.constant 0 : i32
    return %1, %c0_i32 : i32, i32
  }
  func.func @transform_2(%arg0: i32, %arg1: i32) -> (i32, i32) {
    %c0_i32 = arith.constant 0 : i32
    %c0_i32_0 = arith.constant 0 : i32
    return %arg0, %c0_i32 : i32, i32
  }
}

</mosaic_0001>

<llo_original>
// kernel: recon_loss.1
$region0: #{recon_loss.1}
  #allocation0 [shape = 'u32[]', space=smem, size = 0x4, offset = 0x4, fixed_abs, tag = 'smem constant byte address 0x4 - core index']
  #allocation1 [shape = 'u32[72,128]{1,0:T(1,128)}', space=vmem, size = 0x9000, scoped, tag = 'internal scratch']
  #allocation2 [shape = 'f32[8,128]{1,0:T(8,128)}', space=vmem, size = 0x1000, scoped, tag = 'scratch operand']
  %s0 = inlined_call_operand.vmem [shape: f32[16,128], index: 0, kind: input, shape index: {}]
  %s1 = inlined_call_operand.vmem [shape: f32[16,128], index: 1, kind: input, shape index: {}]
  %s2 = inlined_call_operand.vmem [shape: f32[8,128], index: 2, kind: output, shape index: {}]
  %s3 = sld [smem:[#allocation0]]
  $region26: #{recon_loss.1} parent=0
    _
  %s5 = ssub.s32 1, %s3
  %s6 = scalar_select 0, %s5, %s3
  // Predicated region
  $region2: #{recon_loss.1} parent=0 // pred_check
    _
  $region3: #{recon_loss.1} parent=0 // pred_check_branch
    %8 = sbr.rel (0) target = $region5
  $region4: #{recon_loss.1} parent=0 // pred_region
    %s9 = sadd.s32 0, 0
    %s10 = smul.u32 2, %s9
    %p11 = scmp.lt.s32.totalorder %s10, 1
    %s12 = scalar_select %p11, %s10, 1
    %s13 = smul.addr %s12, 8
    %s14 = scalar_lea.vmem %s0, %s13
    %s15 = sadd.s32 0, 0
    %s16 = smul.u32 2, %s15
  $region5: #{recon_loss.1} parent=0 // pred_fallthru
    _
  // Predicated region
  $region6: #{recon_loss.1} parent=0 // pred_check
    _
  $region7: #{recon_loss.1} parent=0 // pred_check_branch
    %18 = sbr.rel (0) target = $region9
  $region8: #{recon_loss.1} parent=0 // pred_region
    %s19 = sadd.s32 0, 0
    %s20 = smul.u32 2, %s19
    %p21 = scmp.lt.s32.totalorder %s20, 1
    %s22 = scalar_select %p21, %s20, 1
    %s23 = smul.addr %s22, 8
    %s24 = scalar_lea.vmem %s1, %s23
    %s25 = sadd.s32 0, 0
    %s26 = smul.u32 2, %s25
  $region9: #{recon_loss.1} parent=0 // pred_fallthru
    _
  %s27 = sadd.s32 0, 0
  %s28 = smul.u32 2, %s27
  %p29 = scmp.lt.s32.totalorder %s28, 1
  %s30 = scalar_select %p29, %s28, 1
  %s31 = smul.addr %s30, 8
  %s32 = scalar_lea.vmem %s0, %s31
  %s33 = sadd.s32 0, 0
  %s34 = smul.u32 2, %s33
  %p35 = scmp.lt.s32.totalorder %s34, 1
  %s36 = scalar_select %p35, %s34, 1
  %s37 = smul.addr %s36, 8
  %s38 = scalar_lea.vmem %s1, %s37
  %s39 = sadd.s32 0, 0
  %s40 = smul.u32 2, %s39
  %p41 = scmp.lt.s32.totalorder %s40, 1
  %s42 = scalar_select %p41, %s40, 1
  %s43 = smul.addr %s42, 8
  %s44 = scalar_lea.vmem %s0, %s43
  %s45 = sadd.s32 0, 0
  %s46 = smul.u32 2, %s45
  %s47 = sadd.s32 0, 0
  %s48 = smul.u32 2, %s47
  %p49 = scmp.lt.s32.totalorder %s48, 1
  %s50 = scalar_select %p49, %s48, 1
  %s51 = smul.addr %s50, 8
  %s52 = scalar_lea.vmem %s1, %s51
  %s53 = sadd.s32 0, 0
  %s54 = smul.u32 2, %s53
  %p55 = scmp.eq.s32.totalorder 0, 0
  // Predicated region
  $region10: #{recon_loss.1} parent=0 // pred_check
    %p56 = pneg %p55
  $region11: #{recon_loss.1} parent=0 // pred_check_branch
    %58 = sbr.rel (%p56) target = $region13
  $region12: #{recon_loss.1} parent=0 // pred_region
    %59 = vst [vmem:[#allocation2] sm:$0xff] 0.0
  $region13: #{recon_loss.1} parent=0 // pred_fallthru
    _
  %v60 = vld [vmem:[%s44] sm:$0xff]
  %v61 = vld [vmem:[%s44 + $0x8] sm:$0xff]
  %v62 = vld [vmem:[%s52] sm:$0xff]
  %v63 = vld [vmem:[%s52 + $0x8] sm:$0xff]
  %v64 = vsub.f32 %v60, %v62
  %v65 = vsub.f32 %v61, %v63
  %v66 = vmul.f32 %v64, %v64
  %v67 = vmul.f32 %v65, %v65
  %s68 = sadd.s32 0, 0
  %s69 = smul.u32 %s68, 16
  %v70 = vlaneseq
  %v71 = vshrl.u32 %v70, 7
  %v72 = vadd.s32 %v71, 8
  %v73 = vstv %s69
  %v74 = vadd.s32 %v73, %v71
  %v75 = vadd.s32 %v73, %v72
  %vm76 = vcmp.lt.s32.totalorder %v74, 16
  %vm77 = vcmp.lt.s32.totalorder %v75, 16
  %v78 = vsel %vm76, %v66, 0.0
  %v79 = vsel %vm77, %v67, 0.0
  %v80 = vld [vmem:[#allocation2] sm:$0xff]
  %v81 = vadd.f32 %v78, %v79
  %v82 = vadd.f32 %v80, %v81
  %83 = vst [vmem:[#allocation2] sm:$0xff] %v82
  // Predicated region
  $region14: #{recon_loss.1} parent=0 // pred_check
    %p84 = pneg %p55
  $region15: #{recon_loss.1} parent=0 // pred_check_branch
    %86 = sbr.rel (%p84) target = $region17
  $region16: #{recon_loss.1} parent=0 // pred_region
    %v87 = vld [vmem:[#allocation2] sm:$0xff]
    %88 = vst [vmem:[%s2] sm:$0xff] %v87
  $region17: #{recon_loss.1} parent=0 // pred_fallthru
    _
  // Predicated region
  $region18: #{recon_loss.1} parent=0 // pred_check
    _
  $region19: #{recon_loss.1} parent=0 // pred_check_branch
    %90 = sbr.rel (0) target = $region21
  $region20: #{recon_loss.1} parent=0 // pred_region
    _
  $region21: #{recon_loss.1} parent=0 // pred_fallthru
    _
  // Predicated region
  $region22: #{recon_loss.1} parent=0 // pred_check
    _
  $region23: #{recon_loss.1} parent=0 // pred_check_branch
    %92 = sbr.rel (0) target = $region25
  $region24: #{recon_loss.1} parent=0 // pred_region
    _
  $region25: #{recon_loss.1} parent=0 // pred_fallthru
    _

</llo_original>
